<compile_context>
chip_gen: v5e
topology: v5e:2x2
jax: 0.10.0
libtpu: 0.0.40
codegen_flags: <defaults>
</compile_context>

<pallas_src>
import functools

import jax
import jax.numpy as jnp
from jax import lax
from jax.experimental import pallas as pl
from jax.experimental.pallas import tpu as pltpu

CE_WEIGHT = 0.5
DICE_WEIGHT = 0.5
SMOOTH = 1.0

_SUB = 512                     # inner sub-block width (lanes) per loop step
_SMALL_TILE = 2048             # tiles at/below this are processed in one shot
_TARGET_BLOCK_BYTES = 2 << 20  # byte budget for the pred block per grid step


def _accumulate_block(logits, labels, valid, num_classes,
                      acc_ce, acc_inter, acc_psum, acc_tsum):
    """Accumulate CE / dice statistics for one (C, S) sub-block of pixels."""
    C, S = logits.shape
    if valid is not None:
        # Keep padded lanes finite (uninitialized VMEM may hold NaN/Inf) and
        # route their labels out of range so they hit no class.
        logits = jnp.where(valid, logits, 0.0)
        labels = jnp.where(valid, labels, num_classes)

    # Softmax over the class (sublane) axis.
    m = jnp.max(logits, axis=0, keepdims=True)            # (1, S)
    e = jnp.exp(logits - m)                                # (C, S)
    s = jnp.sum(e, axis=0, keepdims=True)                  # (1, S)
    # NOTE: approx=True would move this divide onto the EUP (v7x micro-opt);
    # kept exact so the 1e-5 reference tolerance holds on every generation.
    inv_s = pl.reciprocal(s)
    if valid is not None:
        inv_s = jnp.where(valid, inv_s, 0.0)               # p == 0 on padded lanes
    p = e * inv_s                                          # (C, S) softmax
    lse = m + jnp.log(s)                                   # (1, S)

    cls = jax.lax.broadcasted_iota(jnp.int32, (C, S), 0) == labels   # (C, S)
    picked = jnp.sum(jnp.where(cls, logits, 0.0), axis=0, keepdims=True)
    ce_terms = lse - picked                                # (1, S)
    if valid is not None:
        ce_terms = jnp.where(valid, ce_terms, 0.0)

    inter = jnp.where(cls, p, 0.0)                         # (C, S)
    tcnt = cls.astype(jnp.float32)                         # (C, S)

    terms = (ce_terms, inter, p, tcnt)
    accs = (acc_ce, acc_inter, acc_psum, acc_tsum)
    if S % 128 == 0:
        # Lane-wide accumulation: plain VPU adds only; the cross-lane (XLU)
        # reduction is deferred to the finalize block.
        for t, a in zip(terms, accs):
            folded = t[:, 0:128]
            for k in range(1, S // 128):
                folded = folded + t[:, k * 128:(k + 1) * 128]
            a[...] += folded
    else:
        # Rare non-lane-aligned tile (N < 128 or odd width): reduce here and
        # deposit the partial sums in lane 0 only.
        lane0 = jax.lax.broadcasted_iota(jnp.int32, (1, 128), 1) < 1
        a_ce, a_in, a_ps, a_ts = accs
        a_ce[...] += jnp.where(lane0, jnp.sum(ce_terms, keepdims=True), 0.0)
        a_in[...] += jnp.where(lane0, jnp.sum(inter, axis=1, keepdims=True), 0.0)
        a_ps[...] += jnp.where(lane0, jnp.sum(p, axis=1, keepdims=True), 0.0)
        a_ts[...] += jnp.where(lane0, jnp.sum(tcnt, axis=1, keepdims=True), 0.0)


def _combined_loss_kernel(pred_ref, tgt_ref, out_ref,
                          acc_ce, acc_inter, acc_psum, acc_tsum,
                          *, n_total, tile_n, sub_n, has_tail, num_classes):
    nt = pl.program_id(1)
    n_tiles = pl.num_programs(1)
    n_sub = tile_n // sub_n

    @pl.when(nt == 0)
    def _():
        acc_ce[...] = jnp.zeros_like(acc_ce)
        acc_inter[...] = jnp.zeros_like(acc_inter)
        acc_psum[...] = jnp.zeros_like(acc_psum)
        acc_tsum[...] = jnp.zeros_like(acc_tsum)

    def process(masked):
        def block(i):
            if n_sub == 1:
                off = 0
                logits = pred_ref[0].astype(jnp.float32)        # (C, TN)
                labels = tgt_ref[0].astype(jnp.int32)           # (1, TN)
            else:
                off = pl.multiple_of(i * sub_n, sub_n)
                logits = pred_ref[0, :, pl.ds(off, sub_n)].astype(jnp.float32)
                labels = tgt_ref[0, :, pl.ds(off, sub_n)].astype(jnp.int32)
            if masked:
                lane = jax.lax.broadcasted_iota(
                    jnp.int32, (1, logits.shape[1]), 1)
                valid = (nt * tile_n + off + lane) < n_total
            else:
                valid = None
            _accumulate_block(logits, labels, valid, num_classes,
                              acc_ce, acc_inter, acc_psum, acc_tsum)

        if n_sub == 1:
            block(0)
        else:
            def body(i, carry):
                block(i)
                return carry
            lax.fori_loop(0, n_sub, body, 0)

    if has_tail:
        @pl.when(nt != n_tiles - 1)
        def _():
            process(masked=False)     # unmasked fast path

        @pl.when(nt == n_tiles - 1)
        def _():
            process(masked=True)      # masked path, last tile only
    else:
        process(masked=False)         # no tail: masking removed at trace time

    @pl.when(nt == n_tiles - 1)
    def _():
        ce_b = jnp.sum(acc_ce[...], keepdims=True)               # (1, 1)
        inter = jnp.sum(acc_inter[...], axis=1, keepdims=True)   # (C, 1)
        psum = jnp.sum(acc_psum[...], axis=1, keepdims=True)     # (C, 1)
        tsum = jnp.sum(acc_tsum[...], axis=1, keepdims=True)     # (C, 1)
        dice = (2.0 * inter + SMOOTH) / (psum + tsum + SMOOTH)   # (C, 1)
        dice_b = jnp.sum(dice, keepdims=True)                    # (1, 1)
        row = jax.lax.broadcasted_iota(jnp.int32, (1, 2, 128), 1)
        out_ref[...] = jnp.where(row == 0, ce_b, dice_b)


def _choose_tiles(n, c, itemsize):
    """Pick (TN, SUB) from a byte budget; TN is a multiple of SUB when tiled."""
    if n <= _SMALL_TILE:
        return n, n                     # single tile, single shot
    cap = _TARGET_BLOCK_BYTES // max(1, c * itemsize)
    cap = max(_SUB, (cap // _SUB) * _SUB)
    tn = min((n // _SUB) * _SUB, cap)
    return tn, _SUB


def combined_loss(pred, target):
    """pred: [B, C, H, W] (any float dtype), target: [B, H, W] int -> scalar."""
    B, C, H, W = pred.shape
    N = H * W
    pred_r = pred.reshape(B, C, N)        # native dtype: no f32 HBM copy
    tgt_r = target.reshape(B, 1, N)

    itemsize = jnp.dtype(pred.dtype).itemsize
    TN, SUB = _choose_tiles(N, C, itemsize)
    grid_n = pl.cdiv(N, TN)
    has_tail = (N % TN) != 0

    # Explicit VMEM budget: double-buffered input blocks + in-kernel
    # temporaries + lane-wide accumulators, with 2x headroom, kept under
    # v7x's 64 MiB physical VMEM.
    est = 2 * (C * TN * itemsize + TN * 4)
    est += 12 * max(8, C) * max(128, SUB) * 4
    est += (3 * C + 4) * 128 * 4
    vmem_limit = int(min(56 << 20, max(24 << 20, 2 * est)))

    kernel = functools.partial(
        _combined_loss_kernel, n_total=N, tile_n=TN, sub_n=SUB,
        has_tail=has_tail, num_classes=C)

    out = pl.pallas_call(
        kernel,
        out_shape=jax.ShapeDtypeStruct((B, 2, 128), jnp.float32),
        grid_spec=pltpu.PrefetchScalarGridSpec(
            num_scalar_prefetch=0,
            grid=(B, grid_n),
            in_specs=[
                pl.BlockSpec((1, C, TN), lambda b, n: (b, 0, n)),
                pl.BlockSpec((1, 1, TN), lambda b, n: (b, 0, n)),
            ],
            out_specs=pl.BlockSpec((1, 2, 128), lambda b, n: (b, 0, 0)),
            scratch_shapes=[
                pltpu.VMEM((1, 128), jnp.float32),   # CE partial sums (lane-wide)
                pltpu.VMEM((C, 128), jnp.float32),   # intersection per class
                pltpu.VMEM((C, 128), jnp.float32),   # softmax sum per class
                pltpu.VMEM((C, 128), jnp.float32),   # target count per class
            ],
        ),
        compiler_params=pltpu.CompilerParams(
            dimension_semantics=("parallel", "arbitrary"),
            vmem_limit_bytes=vmem_limit,
        ),
    )(pred_r, tgt_r)

    # Tiny final reduction + weighting in plain JAX (keeps B axis parallel).
    ce_sum = jnp.sum(out[:, 0, 0])
    dice_sum = jnp.sum(out[:, 1, 0])
    ce = ce_sum / jnp.float32(B * N)
    dl = 1.0 - dice_sum / jnp.float32(B * C)
    return CE_WEIGHT * ce + DICE_WEIGHT * dl


def _reference_loss(pred, target):
    """Pure-JAX reference mirroring the PyTorch module."""
    B, C, H, W = pred.shape
    logits = pred.reshape(B, C, -1).astype(jnp.float32)
    onehot = jax.nn.one_hot(target.reshape(B, -1), C, axis=1)  # (B, C, N)
    logp = jax.nn.log_softmax(logits, axis=1)
    ce = -jnp.mean(jnp.sum(logp * onehot, axis=1))
    p = jax.nn.softmax(logits, axis=1)
    inter = jnp.sum(p * onehot, axis=2)
    union = jnp.sum(p, axis=2) + jnp.sum(onehot, axis=2)
    dice = (2.0 * inter + SMOOTH) / (union + SMOOTH)
    dl = 1.0 - jnp.mean(dice)
    return CE_WEIGHT * ce + DICE_WEIGHT * dl


if __name__ == "__main__":
    key = jax.random.PRNGKey(0)
    k_pred, k_tgt = jax.random.split(key)

    B, C, H, W = 2, 4, 16, 16
    pred = jax.random.normal(k_pred, (B, C, H, W), dtype=jnp.float32)
    target = jax.random.randint(k_tgt, (B, H, W), 0, C, dtype=jnp.int32)

    loss = combined_loss(pred, target)
    jax.block_until_ready(loss)

    ref = _reference_loss(pred, target)
    assert jnp.allclose(loss, ref, atol=1e-5, rtol=1e-5), (loss, ref)

    print("KERNEL_OK")
</pallas_src>

<mosaic_0001>
module attributes {stable_mosaic.version = 11 : i64} {
  func.func @_combined_loss_kernel(%arg0: i32, %arg1: i32, %arg2: memref<1x4x256xf32, #tpu.memory_space<vmem>>, %arg3: memref<1x1x256xi32, #tpu.memory_space<vmem>>, %arg4: memref<1x2x128xf32, #tpu.memory_space<vmem>>, %arg5: memref<1x128xf32, #tpu.memory_space<vmem>>, %arg6: memref<4x128xf32, #tpu.memory_space<vmem>>, %arg7: memref<4x128xf32, #tpu.memory_space<vmem>>, %arg8: memref<4x128xf32, #tpu.memory_space<vmem>>) attributes {dimension_semantics = [#tpu.dimension_semantics<parallel>, #tpu.dimension_semantics<arbitrary>], iteration_bounds = array<i64: 2, 1>, scalar_prefetch = 0 : i64, scratch_operands = 4 : i64, tpu.core_type = #tpu.core_type<tc>, window_params = [{transform_indices = @transform_0, window_bounds = array<i64: 1, 4, 256>}, {transform_indices = @transform_1, window_bounds = array<i64: 1, 1, 256>}, {transform_indices = @transform_2, window_bounds = array<i64: 1, 2, 128>}]} {
    %c0_i32 = arith.constant 0 : i32
    %0 = arith.cmpi eq, %arg1, %c0_i32 : i32
    %1 = arith.extui %0 : i1 to i32
    %c0_i32_0 = arith.constant 0 : i32
    %2 = arith.cmpi ne, %1, %c0_i32_0 : i32
    scf.if %2 {
      %cst_28 = arith.constant 0.000000e+00 : f32
      %58 = vector.broadcast %cst_28 : f32 to vector<1x128xf32>
      %c0_29 = arith.constant 0 : index
      %c0_30 = arith.constant 0 : index
      %59 = vector.load %arg5[%c0_29, %c0_30] : memref<1x128xf32, #tpu.memory_space<vmem>>, vector<1x128xf32>
      tpu.vector_store %arg5[%c0_29, %c0_30], %58 {strides = array<i32>} : memref<1x128xf32, #tpu.memory_space<vmem>>, vector<1x128xf32>,
      %cst_31 = arith.constant 0.000000e+00 : f32
      %60 = vector.broadcast %cst_31 : f32 to vector<4x128xf32>
      %c0_32 = arith.constant 0 : index
      %c0_33 = arith.constant 0 : index
      %61 = vector.load %arg6[%c0_32, %c0_33] : memref<4x128xf32, #tpu.memory_space<vmem>>, vector<4x128xf32>
      tpu.vector_store %arg6[%c0_32, %c0_33], %60 {strides = array<i32>} : memref<4x128xf32, #tpu.memory_space<vmem>>, vector<4x128xf32>,
      %cst_34 = arith.constant 0.000000e+00 : f32
      %62 = vector.broadcast %cst_34 : f32 to vector<4x128xf32>
      %c0_35 = arith.constant 0 : index
      %c0_36 = arith.constant 0 : index
      %63 = vector.load %arg7[%c0_35, %c0_36] : memref<4x128xf32, #tpu.memory_space<vmem>>, vector<4x128xf32>
      tpu.vector_store %arg7[%c0_35, %c0_36], %62 {strides = array<i32>} : memref<4x128xf32, #tpu.memory_space<vmem>>, vector<4x128xf32>,
      %cst_37 = arith.constant 0.000000e+00 : f32
      %64 = vector.broadcast %cst_37 : f32 to vector<4x128xf32>
      %c0_38 = arith.constant 0 : index
      %c0_39 = arith.constant 0 : index
      %65 = vector.load %arg8[%c0_38, %c0_39] : memref<4x128xf32, #tpu.memory_space<vmem>>, vector<4x128xf32>
      tpu.vector_store %arg8[%c0_38, %c0_39], %64 {strides = array<i32>} : memref<4x128xf32, #tpu.memory_space<vmem>>, vector<4x128xf32>,
    } else {
    }
    %c0 = arith.constant 0 : index
    %c0_1 = arith.constant 0 : index
    %c0_2 = arith.constant 0 : index
    %3 = vector.load %arg2[%c0, %c0_1, %c0_2] : memref<1x4x256xf32, #tpu.memory_space<vmem>>, vector<1x4x256xf32>
    %4 = vector.shape_cast %3 : vector<1x4x256xf32> to vector<4x256xf32>
    %c0_3 = arith.constant 0 : index
    %c0_4 = arith.constant 0 : index
    %c0_5 = arith.constant 0 : index
    %5 = vector.load %arg3[%c0_3, %c0_4, %c0_5] : memref<1x1x256xi32, #tpu.memory_space<vmem>>, vector<1x1x256xi32>
    %6 = vector.shape_cast %5 : vector<1x1x256xi32> to vector<1x256xi32>
    %cst = arith.constant dense<0xFF800000> : vector<256xf32>
    %7 = vector.multi_reduction <maximumf>, %4, %cst [0] : vector<4x256xf32> to vector<256xf32>
    %8 = vector.shape_cast %7 : vector<256xf32> to vector<1x256xf32>
    %9 = vector.broadcast %8 : vector<1x256xf32> to vector<4x256xf32>
    %10 = arith.subf %4, %9 : vector<4x256xf32>
    %11 = math.exp %10 : vector<4x256xf32>
    %cst_6 = arith.constant dense<0.000000e+00> : vector<256xf32>
    %12 = vector.multi_reduction <add>, %11, %cst_6 [0] : vector<4x256xf32> to vector<256xf32>
    %13 = vector.shape_cast %12 : vector<256xf32> to vector<1x256xf32>
    %14 = tpu.reciprocal %13 : vector<1x256xf32> -> vector<1x256xf32>
    %15 = vector.broadcast %14 : vector<1x256xf32> to vector<4x256xf32>
    %16 = arith.mulf %11, %15 : vector<4x256xf32>
    %17 = math.log %13 : vector<1x256xf32>
    %18 = arith.addf %8, %17 : vector<1x256xf32>
    %19 = tpu.iota {dimensions = array<i32: 0>} : vector<4x256xi32>
    %20 = vector.broadcast %6 : vector<1x256xi32> to vector<4x256xi32>
    %21 = arith.cmpi eq, %19, %20 : vector<4x256xi32>
    %cst_7 = arith.constant 0.000000e+00 : f32
    %22 = vector.broadcast %cst_7 : f32 to vector<4x256xf32>
    %23 = arith.select %21, %4, %22 : vector<4x256xi1>, vector<4x256xf32>
    %cst_8 = arith.constant dense<0.000000e+00> : vector<256xf32>
    %24 = vector.multi_reduction <add>, %23, %cst_8 [0] : vector<4x256xf32> to vector<256xf32>
    %25 = vector.shape_cast %24 : vector<256xf32> to vector<1x256xf32>
    %26 = arith.subf %18, %25 : vector<1x256xf32>
    %cst_9 = arith.constant 0.000000e+00 : f32
    %27 = vector.broadcast %cst_9 : f32 to vector<4x256xf32>
    %28 = arith.select %21, %16, %27 : vector<4x256xi1>, vector<4x256xf32>
    %29 = arith.extui %21 : vector<4x256xi1> to vector<4x256xi32>
    %30 = arith.sitofp %29 : vector<4x256xi32> to vector<4x256xf32>
    %31 = vector.extract_strided_slice %26 {offsets = [0, 0], sizes = [1, 128], strides = [1, 1]} : vector<1x256xf32> to vector<1x128xf32>
    %32 = vector.extract_strided_slice %26 {offsets = [0, 128], sizes = [1, 128], strides = [1, 1]} : vector<1x256xf32> to vector<1x128xf32>
    %33 = arith.addf %31, %32 : vector<1x128xf32>
    %c0_10 = arith.constant 0 : index
    %c0_11 = arith.constant 0 : index
    %34 = vector.load %arg5[%c0_10, %c0_11] : memref<1x128xf32, #tpu.memory_space<vmem>>, vector<1x128xf32>
    %35 = arith.addf %34, %33 : vector<1x128xf32>
    %c0_12 = arith.constant 0 : index
    %c0_13 = arith.constant 0 : index
    %36 = vector.load %arg5[%c0_12, %c0_13] : memref<1x128xf32, #tpu.memory_space<vmem>>, vector<1x128xf32>
    tpu.vector_store %arg5[%c0_12, %c0_13], %35 {strides = array<i32>} : memref<1x128xf32, #tpu.memory_space<vmem>>, vector<1x128xf32>,
    %37 = vector.extract_strided_slice %28 {offsets = [0, 0], sizes = [4, 128], strides = [1, 1]} : vector<4x256xf32> to vector<4x128xf32>
    %38 = vector.extract_strided_slice %28 {offsets = [0, 128], sizes = [4, 128], strides = [1, 1]} : vector<4x256xf32> to vector<4x128xf32>
    %39 = arith.addf %37, %38 : vector<4x128xf32>
    %c0_14 = arith.constant 0 : index
    %c0_15 = arith.constant 0 : index
    %40 = vector.load %arg6[%c0_14, %c0_15] : memref<4x128xf32, #tpu.memory_space<vmem>>, vector<4x128xf32>
    %41 = arith.addf %40, %39 : vector<4x128xf32>
    %c0_16 = arith.constant 0 : index
    %c0_17 = arith.constant 0 : index
    %42 = vector.load %arg6[%c0_16, %c0_17] : memref<4x128xf32, #tpu.memory_space<vmem>>, vector<4x128xf32>
    tpu.vector_store %arg6[%c0_16, %c0_17], %41 {strides = array<i32>} : memref<4x128xf32, #tpu.memory_space<vmem>>, vector<4x128xf32>,
    %43 = vector.extract_strided_slice %16 {offsets = [0, 0], sizes = [4, 128], strides = [1, 1]} : vector<4x256xf32> to vector<4x128xf32>
    %44 = vector.extract_strided_slice %16 {offsets = [0, 128], sizes = [4, 128], strides = [1, 1]} : vector<4x256xf32> to vector<4x128xf32>
    %45 = arith.addf %43, %44 : vector<4x128xf32>
    %c0_18 = arith.constant 0 : index
    %c0_19 = arith.constant 0 : index
    %46 = vector.load %arg7[%c0_18, %c0_19] : memref<4x128xf32, #tpu.memory_space<vmem>>, vector<4x128xf32>
    %47 = arith.addf %46, %45 : vector<4x128xf32>
    %c0_20 = arith.constant 0 : index
    %c0_21 = arith.constant 0 : index
    %48 = vector.load %arg7[%c0_20, %c0_21] : memref<4x128xf32, #tpu.memory_space<vmem>>, vector<4x128xf32>
    tpu.vector_store %arg7[%c0_20, %c0_21], %47 {strides = array<i32>} : memref<4x128xf32, #tpu.memory_space<vmem>>, vector<4x128xf32>,
    %49 = vector.extract_strided_slice %30 {offsets = [0, 0], sizes = [4, 128], strides = [1, 1]} : vector<4x256xf32> to vector<4x128xf32>
    %50 = vector.extract_strided_slice %30 {offsets = [0, 128], sizes = [4, 128], strides = [1, 1]} : vector<4x256xf32> to vector<4x128xf32>
    %51 = arith.addf %49, %50 : vector<4x128xf32>
    %c0_22 = arith.constant 0 : index
    %c0_23 = arith.constant 0 : index
    %52 = vector.load %arg8[%c0_22, %c0_23] : memref<4x128xf32, #tpu.memory_space<vmem>>, vector<4x128xf32>
    %53 = arith.addf %52, %51 : vector<4x128xf32>
    %c0_24 = arith.constant 0 : index
    %c0_25 = arith.constant 0 : index
    %54 = vector.load %arg8[%c0_24, %c0_25] : memref<4x128xf32, #tpu.memory_space<vmem>>, vector<4x128xf32>
    tpu.vector_store %arg8[%c0_24, %c0_25], %53 {strides = array<i32>} : memref<4x128xf32, #tpu.memory_space<vmem>>, vector<4x128xf32>,
    %c0_i32_26 = arith.constant 0 : i32
    %55 = arith.cmpi eq, %arg1, %c0_i32_26 : i32
    %56 = arith.extui %55 : i1 to i32
    %c0_i32_27 = arith.constant 0 : i32
    %57 = arith.cmpi ne, %56, %c0_i32_27 : i32
    scf.if %57 {
      %c0_28 = arith.constant 0 : index
      %c0_29 = arith.constant 0 : index
      %58 = vector.load %arg5[%c0_28, %c0_29] : memref<1x128xf32, #tpu.memory_space<vmem>>, vector<1x128xf32>
      %59 = vector.shape_cast %58 : vector<1x128xf32> to vector<1x1x128xf32>
      %cst_30 = arith.constant dense<0.000000e+00> : vector<1xf32>
      %60 = vector.multi_reduction <add>, %59, %cst_30 [1, 2] : vector<1x1x128xf32> to vector<1xf32>
      %61 = vector.shape_cast %60 : vector<1xf32> to vector<1x1x1xf32>
      %62 = vector.extract %61[0, 0, 0] : f32 from vector<1x1x1xf32>
      %63 = vector.broadcast %62 : f32 to vector<1x1xf32>
      %c0_31 = arith.constant 0 : index
      %c0_32 = arith.constant 0 : index
      %64 = vector.load %arg6[%c0_31, %c0_32] : memref<4x128xf32, #tpu.memory_space<vmem>>, vector<4x128xf32>
      %cst_33 = arith.constant dense<0.000000e+00> : vector<4xf32>
      %65 = vector.multi_reduction <add>, %64, %cst_33 [1] : vector<4x128xf32> to vector<4xf32>
      %66 = vector.shape_cast %65 : vector<4xf32> to vector<4x1xf32>
      %c0_34 = arith.constant 0 : index
      %c0_35 = arith.constant 0 : index
      %67 = vector.load %arg7[%c0_34, %c0_35] : memref<4x128xf32, #tpu.memory_space<vmem>>, vector<4x128xf32>
      %cst_36 = arith.constant dense<0.000000e+00> : vector<4xf32>
      %68 = vector.multi_reduction <add>, %67, %cst_36 [1] : vector<4x128xf32> to vector<4xf32>
      %69 = vector.shape_cast %68 : vector<4xf32> to vector<4x1xf32>
      %c0_37 = arith.constant 0 : index
      %c0_38 = arith.constant 0 : index
      %70 = vector.load %arg8[%c0_37, %c0_38] : memref<4x128xf32, #tpu.memory_space<vmem>>, vector<4x128xf32>
      %cst_39 = arith.constant dense<0.000000e+00> : vector<4xf32>
      %71 = vector.multi_reduction <add>, %70, %cst_39 [1] : vector<4x128xf32> to vector<4xf32>
      %72 = vector.shape_cast %71 : vector<4xf32> to vector<4x1xf32>
      %cst_40 = arith.constant 2.000000e+00 : f32
      %73 = vector.broadcast %cst_40 : f32 to vector<4x1xf32>
      %74 = arith.mulf %73, %66 : vector<4x1xf32>
      %cst_41 = arith.constant 1.000000e+00 : f32
      %75 = vector.broadcast %cst_41 : f32 to vector<4x1xf32>
      %76 = arith.addf %74, %75 : vector<4x1xf32>
      %77 = arith.addf %69, %72 : vector<4x1xf32>
      %cst_42 = arith.constant 1.000000e+00 : f32
      %78 = vector.broadcast %cst_42 : f32 to vector<4x1xf32>
      %79 = arith.addf %77, %78 : vector<4x1xf32>
      %80 = arith.divf %76, %79 : vector<4x1xf32>
      %81 = vector.shape_cast %80 : vector<4x1xf32> to vector<1x4x1xf32>
      %cst_43 = arith.constant dense<0.000000e+00> : vector<1xf32>
      %82 = vector.multi_reduction <add>, %81, %cst_43 [1, 2] : vector<1x4x1xf32> to vector<1xf32>
      %83 = vector.shape_cast %82 : vector<1xf32> to vector<1x1x1xf32>
      %84 = vector.extract %83[0, 0, 0] : f32 from vector<1x1x1xf32>
      %85 = vector.broadcast %84 : f32 to vector<1x1xf32>
      %86 = tpu.iota {dimensions = array<i32: 1>} : vector<1x2x128xi32>
      %c0_i32_44 = arith.constant 0 : i32
      %87 = vector.broadcast %c0_i32_44 : i32 to vector<1x2x128xi32>
      %88 = arith.cmpi eq, %86, %87 : vector<1x2x128xi32>
      %89 = vector.shape_cast %63 : vector<1x1xf32> to vector<1x1x1xf32>
      %90 = vector.broadcast %89 : vector<1x1x1xf32> to vector<1x2x128xf32>
      %91 = vector.shape_cast %85 : vector<1x1xf32> to vector<1x1x1xf32>
      %92 = vector.broadcast %91 : vector<1x1x1xf32> to vector<1x2x128xf32>
      %93 = arith.select %88, %90, %92 : vector<1x2x128xi1>, vector<1x2x128xf32>
      %c0_45 = arith.constant 0 : index
      %c0_46 = arith.constant 0 : index
      %c0_47 = arith.constant 0 : index
      %94 = vector.load %arg4[%c0_45, %c0_46, %c0_47] : memref<1x2x128xf32, #tpu.memory_space<vmem>>, vector<1x2x128xf32>
      tpu.vector_store %arg4[%c0_45, %c0_46, %c0_47], %93 {strides = array<i32>} : memref<1x2x128xf32, #tpu.memory_space<vmem>>, vector<1x2x128xf32>,
    } else {
    }
    return
  }
  func.func @transform_0(%arg0: i32, %arg1: i32) -> (i32, i32, i32) {
    %c0_i32 = arith.constant 0 : i32
    %c0_i32_0 = arith.constant 0 : i32
    return %arg0, %c0_i32, %arg1 : i32, i32, i32
  }
  func.func @transform_1(%arg0: i32, %arg1: i32) -> (i32, i32, i32) {
    %c0_i32 = arith.constant 0 : i32
    %c0_i32_0 = arith.constant 0 : i32
    return %arg0, %c0_i32, %arg1 : i32, i32, i32
  }
  func.func @transform_2(%arg0: i32, %arg1: i32) -> (i32, i32, i32) {
    %c0_i32 = arith.constant 0 : i32
    %c0_i32_0 = arith.constant 0 : i32
    %c0_i32_1 = arith.constant 0 : i32
    return %arg0, %c0_i32, %c0_i32_0 : i32, i32, i32
  }
}

</mosaic_0001>

<llo_original>
// kernel: tpu_custom_call.1
$region0: #{tpu_custom_call.1}
  #allocation0 [shape = 'u32[]', space=smem, size = 0x4, offset = 0x4, fixed_abs, tag = 'smem constant byte address 0x4 - core index']
  #allocation1 [shape = 'u32[72,128]{1,0:T(1,128)}', space=vmem, size = 0x9000, scoped, tag = 'internal scratch']
  #allocation2 [shape = 'f32[1,128]{1,0:T(1,128)}', space=vmem, size = 0x200, scoped, tag = 'scratch operand']
  #allocation3 [shape = 'f32[4,128]{1,0:T(4,128)}', space=vmem, size = 0x800, scoped, tag = 'scratch operand']
  #allocation4 [shape = 'f32[4,128]{1,0:T(4,128)}', space=vmem, size = 0x800, scoped, tag = 'scratch operand']
  #allocation5 [shape = 'f32[4,128]{1,0:T(4,128)}', space=vmem, size = 0x800, scoped, tag = 'scratch operand']
  %s0 = inlined_call_operand.hbm [shape: f32[2,4,256], index: 0, kind: input, shape index: {}]
  %s1 = inlined_call_operand.hbm [shape: s32[2,1,256], index: 1, kind: input, shape index: {}]
  %s2 = inlined_call_operand.hbm [shape: f32[2,2,128], index: 2, kind: output, shape index: {}]
  %s3 = sld [smem:[#allocation0]]
  $region57: #{tpu_custom_call.1} parent=0
    _
  %s5 = ssub.s32 1, %s3
  %s6 = scalar_select 0, %s5, %s3
  $region1: #{tpu_custom_call.1} parent=0
    #allocation6 [shape = 'u8[8192]{0}', space=vmem, size = 0x2000, scoped, tag = 'input window, operand 0']
    #allocation7 [shape = 's32[2]{0}', space=sflag, size = 0x8, scoped, tag = 'scoped memory for tpu_custom_call.1']
    #allocation8 [shape = 's32[2]{0}', space=sflag, size = 0x8, scoped, tag = 'scoped memory for tpu_custom_call.1']
    #allocation9 [shape = 'u8[2048]{0}', space=vmem, size = 0x800, scoped, tag = 'input window, operand 1']
    #allocation10 [shape = 's32[2]{0}', space=sflag, size = 0x8, scoped, tag = 'scoped memory for tpu_custom_call.1']
    #allocation11 [shape = 'u8[2048]{0}', space=vmem, size = 0x800, scoped, tag = 'output window, operand 0']
    %7 = vsyncpa [#allocation7], 0
    %s8 = scalar_lea.sflag [#allocation7], 1
    %9 = vsyncpa %s8, 0
    %10 = vsyncpa [#allocation10], 0
    %s11 = scalar_lea.sflag [#allocation10], 1
    %12 = vsyncpa %s11, 0
    %13 = vsyncpa [#allocation8], 0
    %s14 = scalar_lea.sflag [#allocation8], 1
    %15 = vsyncpa %s14, 0
    loop: start=0, step=1, limit=4
    $region2: #{tpu_custom_call.1} parent=1 // loop_pre_header
      _
    $region3: #{tpu_custom_call.1} parent=1 // loop_header
      %s17 = sphi 0, %s21
      %p18 = scmp.ge.s32.totalorder %s17, 4
      %s24 = sphi 0, %s36
      %s25 = sphi 0, %s32
      %s26 = sphi 0, %s24
      %s27 = sphi 0, %s25
      %s28 = sphi 0, %s26
      %s29 = sphi 0, %s27
      %s41 = sphi 0, %s43
      %s44 = sphi 0, %s41
      %s45 = sphi 0, %s44
      %s61 = sphi 0, %s45
      %s69 = sphi 0, %s71
      %s72 = sphi 0, %s69
      %s73 = sphi 0, %s72
      %s89 = sphi 0, %s73
      %s95 = sphi 0, %s97
      %s98 = sphi 0, %s95
      %s99 = sphi 0, %s98
      %s115 = sphi 0, %s99
    $region4: #{tpu_custom_call.1} parent=1 // loop_header_branch
      %20 = sbr.rel (%p18) target = $region8
    $region5: #{tpu_custom_call.1} parent=1 // loop_body
      %s22 = ssub.s32 %s17, 1
      %s23 = ssub.s32 %s17, 2
      %s30 = sadd.s32 1, %s25
      %p31 = scmp.ge.s32.totalorder %s30, 1
      %s32 = scalar_select %p31, 0, %s30
      %s33 = sadd.s32 1, %s24
      %s34 = scalar_select %p31, %s33, %s24
      %p35 = scmp.ge.s32.totalorder %s34, 2
      %s36 = scalar_select %p35, 0, %s34
      %s37 = ssub.s32 %s24, %s36
      %s38 = ssub.s32 %s25, %s32
      %s39 = sor.u32 %s37, %s38
      %p40 = scmp.eq.s32.totalorder %s39, 0
      %s42 = sadd.s32 %s41, 1
      %s43 = scalar_select %p40, %s41, %s42
      %p46 = pneg %p40
      %p47 = scmp.eq.s32.totalorder %s17, 1
      %p48 = por %p46, %p47
      %p49 = scmp.ne.s32.totalorder %s41, %s44
      %p50 = scmp.eq.s32.totalorder %s17, 0
      %p51 = por %p49, %p50
      %p52 = scmp.ne.s32.totalorder %s41, %s44
      %p53 = scmp.eq.s32.totalorder %s22, 1
      %p54 = por %p52, %p53
      %p55 = scmp.ne.s32.totalorder %s44, %s45
      %p56 = scmp.eq.s32.totalorder %s22, 0
      %p57 = por %p55, %p56
      %p58 = scmp.ne.s32.totalorder %s44, %s45
      %p59 = scmp.eq.s32.totalorder %s23, 1
      %p60 = por %p58, %p59
      %p62 = scmp.ne.s32.totalorder %s45, %s61
      %p63 = scmp.eq.s32.totalorder %s23, 0
      %p64 = por %p62, %p63
      %s65 = ssub.s32 %s24, %s36
      %s66 = ssub.s32 %s25, %s32
      %s67 = sor.u32 %s65, %s66
      %p68 = scmp.eq.s32.totalorder %s67, 0
      %s70 = sadd.s32 %s69, 1
      %s71 = scalar_select %p68, %s69, %s70
      %p74 = pneg %p68
      %p75 = scmp.eq.s32.totalorder %s17, 1
      %p76 = por %p74, %p75
      %p77 = scmp.ne.s32.totalorder %s69, %s72
      %p78 = scmp.eq.s32.totalorder %s17, 0
      %p79 = por %p77, %p78
      %p80 = scmp.ne.s32.totalorder %s69, %s72
      %p81 = scmp.eq.s32.totalorder %s22, 1
      %p82 = por %p80, %p81
      %p83 = scmp.ne.s32.totalorder %s72, %s73
      %p84 = scmp.eq.s32.totalorder %s22, 0
      %p85 = por %p83, %p84
      %p86 = scmp.ne.s32.totalorder %s72, %s73
      %p87 = scmp.eq.s32.totalorder %s23, 1
      %p88 = por %p86, %p87
      %p90 = scmp.ne.s32.totalorder %s73, %s89
      %p91 = scmp.eq.s32.totalorder %s23, 0
      %p92 = por %p90, %p91
      %s93 = ssub.s32 %s24, %s36
      %p94 = scmp.eq.s32.totalorder %s93, 0
      %s96 = sadd.s32 %s95, 1
      %s97 = scalar_select %p94, %s95, %s96
      %p100 = pneg %p94
      %p101 = scmp.eq.s32.totalorder %s17, 1
      %p102 = por %p100, %p101
      %p103 = scmp.ne.s32.totalorder %s95, %s98
      %p104 = scmp.eq.s32.totalorder %s17, 0
      %p105 = por %p103, %p104
      %p106 = scmp.ne.s32.totalorder %s95, %s98
      %p107 = scmp.eq.s32.totalorder %s22, 1
      %p108 = por %p106, %p107
      %p109 = scmp.ne.s32.totalorder %s98, %s99
      %p110 = scmp.eq.s32.totalorder %s22, 0
      %p111 = por %p109, %p110
      %p112 = scmp.ne.s32.totalorder %s98, %s99
      %p113 = scmp.eq.s32.totalorder %s23, 1
      %p114 = por %p112, %p113
      %p116 = scmp.ne.s32.totalorder %s99, %s115
      %p117 = scmp.eq.s32.totalorder %s23, 0
      %p118 = por %p116, %p117
      %p119 = scmp.le.s32.totalorder 1, %s17
      %p120 = scmp.lt.s32.totalorder %s17, 3
      %p121 = pnand %p119, %p120
      %p122 = pneg %p121
      // Predicated region
      $region9: #{tpu_custom_call.1} parent=5 // pred_check
        _
      $region10: #{tpu_custom_call.1} parent=5 // pred_check_branch
        %124 = sbr.rel (%p121) target = $region12
      $region11: #{tpu_custom_call.1} parent=5 // pred_region
        %s125 = ssub.s32 %s17, 1
      $region12: #{tpu_custom_call.1} parent=5 // pred_fallthru
        _
      %p126 = scmp.lt.s32.totalorder %s17, 2
      // Predicated region
      $region13: #{tpu_custom_call.1} parent=5 // pred_check
        %p127 = pneg %p126
      $region14: #{tpu_custom_call.1} parent=5 // pred_check_branch
        %129 = sbr.rel (%p127) target = $region16
      $region15: #{tpu_custom_call.1} parent=5 // pred_region
        // Predicated region
        $region17: #{tpu_custom_call.1} parent=15 // pred_check
          %p130 = pneg %p51
        $region18: #{tpu_custom_call.1} parent=15 // pred_check_branch
          %132 = sbr.rel (%p130) target = $region20
        $region19: #{tpu_custom_call.1} parent=15 // pred_region
          %s133 = sand.u32 %s41, 1
          %s134 = scalar_lea.sflag [#allocation7], %s133
          %s135 = sand.u32 %s41, 1
          %s136 = smul.addr %s135, 8
          %s137 = scalar_lea.vmem [#allocation6], %s136
          %s138 = smul.u32 2, %s25
          %140 = vsyncadd %s134, 0
          %s141 = smul.addr %s24, 2
          %s142 = sadd.s32 %s138, %s141
          %s143 = smul.addr %s142, 4
          %s144 = scalar_lea.hbm %s0, %s143
          %s146 = sshll.u32 %s144, 4
          %s147 = int_to_ptr.hbm [resolvable:$true] %s146
          %s148 = sshll.u32 %s137, 4
          %s149 = int_to_ptr.vmem [resolvable:$true] %s148
          %151 = dma.hbm_to_vmem [thread:$0]  %s147, 128, %s149, %s134
        $region20: #{tpu_custom_call.1} parent=15 // pred_fallthru
          _
        // Predicated region
        $region21: #{tpu_custom_call.1} parent=15 // pred_check
          %p152 = pneg %p79
        $region22: #{tpu_custom_call.1} parent=15 // pred_check_branch
          %154 = sbr.rel (%p152) target = $region24
        $region23: #{tpu_custom_call.1} parent=15 // pred_region
          %s155 = sand.u32 %s69, 1
          %s156 = scalar_lea.sflag [#allocation10], %s155
          %s157 = sand.u32 %s69, 1
          %s158 = smul.addr %s157, 2
          %s159 = scalar_lea.vmem [#allocation9], %s158
          %s160 = smul.u32 2, %s25
          %162 = vsyncadd %s156, 0
          %s163 = smul.addr %s24, 2
          %s164 = sadd.s32 %s160, %s163
          %s165 = scalar_lea.hbm %s1, %s164
          %s167 = sshll.u32 %s165, 4
          %s168 = int_to_ptr.hbm [resolvable:$true] %s167
          %s169 = sshll.u32 %s159, 4
          %s170 = int_to_ptr.vmem [resolvable:$true] %s169
          %172 = dma.hbm_to_vmem [thread:$0]  %s168, 32, %s170, %s156
        $region24: #{tpu_custom_call.1} parent=15 // pred_fallthru
          _
      $region16: #{tpu_custom_call.1} parent=5 // pred_fallthru
        _
      %p173 = scmp.le.s32.totalorder 1, %s17
      %p174 = scmp.lt.s32.totalorder %s17, 3
      %p175 = pnand %p173, %p174
      %p176 = pneg %p175
      // Predicated region
      $region25: #{tpu_custom_call.1} parent=5 // pred_check
        _
      $region26: #{tpu_custom_call.1} parent=5 // pred_check_branch
        %178 = sbr.rel (%p175) target = $region28
      $region27: #{tpu_custom_call.1} parent=5 // pred_region
        %s179 = ssub.s32 %s17, 1
        %s180 = sand.u32 %s44, 1
        %s181 = scalar_lea.sflag [#allocation7], %s180
        %s182 = sand.u32 %s44, 1
        %s183 = smul.addr %s182, 8
        %s184 = scalar_lea.vmem [#allocation6], %s183
        // Predicated region
        $region29: #{tpu_custom_call.1} parent=27 // pred_check
          %p185 = pneg %p57
        $region30: #{tpu_custom_call.1} parent=27 // pred_check_branch
          %187 = sbr.rel (%p185) target = $region32
        $region31: #{tpu_custom_call.1} parent=27 // pred_region
          %189 = dma.done %s181, 128
        $region32: #{tpu_custom_call.1} parent=27 // pred_fallthru
          _
        %s190 = sand.u32 %s72, 1
        %s191 = scalar_lea.sflag [#allocation10], %s190
        %s192 = sand.u32 %s72, 1
        %s193 = smul.addr %s192, 2
        %s194 = scalar_lea.vmem [#allocation9], %s193
        // Predicated region
        $region33: #{tpu_custom_call.1} parent=27 // pred_check
          %p195 = pneg %p85
        $region34: #{tpu_custom_call.1} parent=27 // pred_check_branch
          %197 = sbr.rel (%p195) target = $region36
        $region35: #{tpu_custom_call.1} parent=27 // pred_region
          %199 = dma.done %s191, 32
        $region36: #{tpu_custom_call.1} parent=27 // pred_fallthru
          _
        %s200 = sand.u32 %s44, 1
        %s201 = scalar_lea.sflag [#allocation7], %s200
        %s202 = sand.u32 %s44, 1
        %s203 = smul.addr %s202, 8
        %s204 = scalar_lea.vmem [#allocation6], %s203
        %p205 = pneg %p57
        %p206 = pneg %p54
        %s207 = sand.u32 %s72, 1
        %s208 = scalar_lea.sflag [#allocation10], %s207
        %s209 = sand.u32 %s72, 1
        %s210 = smul.addr %s209, 2
        %s211 = scalar_lea.vmem [#allocation9], %s210
        %p212 = pneg %p85
        %p213 = pneg %p82
        %p214 = pneg %p111
        %p215 = pneg %p108
        %s216 = sand.u32 %s98, 1
        %s217 = scalar_lea.sflag [#allocation8], %s216
        %s218 = sand.u32 %s98, 1
        %s219 = smul.addr %s218, 2
        %s220 = scalar_lea.vmem [#allocation11], %s219
        %s221 = smul.u32 2, %s27
        %s222 = smul.u32 2, %s27
        %p223 = scmp.eq.s32.totalorder %s27, 0
        // Predicated region
        $region37: #{tpu_custom_call.1} parent=27 // pred_check
          %p224 = pneg %p223
        $region38: #{tpu_custom_call.1} parent=27 // pred_check_branch
          %226 = sbr.rel (%p224) target = $region40
        $region39: #{tpu_custom_call.1} parent=27 // pred_region
          %227 = vst [vmem:[#allocation2] sm:$0x1] 0.0
          %228 = vst [vmem:[#allocation3] sm:$0xf] 0.0
          %229 = vst [vmem:[#allocation4] sm:$0xf] 0.0
          %230 = vst [vmem:[#allocation5] sm:$0xf] 0.0
        $region40: #{tpu_custom_call.1} parent=27 // pred_fallthru
          _
        %v231 = vld [vmem:[%s184] sm:$0xff]
        %v232 = vld [vmem:[%s194] sm:$0x3]
        %234 = vst [vmem:[#allocation1] ss:$2 sm:$0xff] %v231
        %v235 = vld.sshfl [vmem:[#allocation1] sm:$0xff pattern:$0x75316420]
        %v236 = vld.sshfl [vmem:[#allocation1 + $0x8] sm:$0xff pattern:$0x75316420]
        %vm239 = vcmask 1043456
        %v240 = vsel %vm239, %v235, -inf
        %v241 = vrot.slane %v240, 4
        %v242 = vmax.f32 %v240, %v241
        %v243 = vrot.slane %v242, 2
        %v244 = vmax.f32 %v242, %v243
        %v245 = vrot.slane %v244, 1
        %v246 = vmax.f32 %v244, %v245
        %v247 = vsel %vm239, %v236, -inf
        %v248 = vrot.slane %v247, 4
        %v249 = vmax.f32 %v247, %v248
        %v250 = vrot.slane %v249, 2
        %v251 = vmax.f32 %v249, %v250
        %v252 = vrot.slane %v251, 1
        %v253 = vmax.f32 %v251, %v252
        %v256 = vrot.slane %v253, 4
        %v257 = vsel %vm239, %v246, %v256
        %v259 = vsub.f32 %v231, %v257
        %v260 = vmul.f32 %v259, 1.442695
        %v261 = vpow.pop %v260
        %263 = vst [vmem:[#allocation1] ss:$2 sm:$0xff] %v261
        %v264 = vld.sshfl [vmem:[#allocation1] sm:$0xff pattern:$0x75316420]
        %v265 = vld.sshfl [vmem:[#allocation1 + $0x8] sm:$0xff pattern:$0x75316420]
        %v268 = vsel %vm239, %v264, 0.0
        %v269 = vrot.slane %v268, 4
        %v270 = vadd.f32 %v268, %v269
        %v271 = vrot.slane %v270, 2
        %v272 = vadd.f32 %v270, %v271
        %v273 = vrot.slane %v272, 1
        %v274 = vadd.f32 %v272, %v273
        %v275 = vsel %vm239, %v265, 0.0
        %v276 = vrot.slane %v275, 4
        %v277 = vadd.f32 %v275, %v276
        %v278 = vrot.slane %v277, 2
        %v279 = vadd.f32 %v277, %v278
        %v280 = vrot.slane %v279, 1
        %v281 = vadd.f32 %v279, %v280
        %v282 = vrcp.pop %v274
        %v283 = vmul.f32 %v274, %v282
        %v284 = vsub.f32 1.0, %v283
        %v285 = vmul.f32 %v282, %v284
        %v286 = vadd.f32 %v282, %v285
        %vm287 = vweird.f32 %v274
        %vm288 = vweird.f32 %v282
        %vm289 = vmor %vm287, %vm288
        %v290 = vsel %vm289, %v282, %v286
        %v291 = vand.u32 2147483647, %v274
        %vm292 = vcmp.eq.f32.partialorder %v291, 8.507059e+37
        %v293 = vand.u32 %v274, 2147483648
        %v294 = vor.u32 1.1754944e-38, %v293
        %v295 = vsel %vm292, %v294, %v290
        %v296 = vrcp.pop %v281
        %v297 = vmul.f32 %v281, %v296
        %v298 = vsub.f32 1.0, %v297
        %v299 = vmul.f32 %v296, %v298
        %v300 = vadd.f32 %v296, %v299
        %vm301 = vweird.f32 %v281
        %vm302 = vweird.f32 %v296
        %vm303 = vmor %vm301, %vm302
        %v304 = vsel %vm303, %v296, %v300
        %v305 = vand.u32 2147483647, %v281
        %vm306 = vcmp.eq.f32.partialorder %v305, 8.507059e+37
        %v307 = vand.u32 %v281, 2147483648
        %v308 = vor.u32 1.1754944e-38, %v307
        %v309 = vsel %vm306, %v308, %v304
        %v312 = vrot.slane %v309, 4
        %v313 = vsel %vm239, %v295, %v312
        %v315 = vmul.f32 %v261, %v313
        %v316 = vlog2.pop %v274
        %v317 = vmul.f32 %v316, 0.6931472
        %v318 = vlog2.pop %v281
        %v319 = vmul.f32 %v318, 0.6931472
        %v320 = vadd.f32 %v246, %v317
        %v321 = vadd.f32 %v253, %v319
        %v322 = vlaneseq
        %v323 = vshrl.u32 %v322, 7
        %v324 = vperm.slane %v232, 0
        %v325 = vperm.slane %v232, 1
        %vm326 = vcmp.eq.s32.totalorder %v323, %v324
        %vm327 = vcmp.eq.s32.totalorder %v323, %v325
        %328 = vst [vmem:[#allocation1] ss:$2 sm:$0xff] %v231
        %v329 = vld.sshfl [vmem:[#allocation1] sm:$0xff pattern:$0x75316420]
        %v330 = vld.sshfl [vmem:[#allocation1 + $0x8] sm:$0xff pattern:$0x75316420]
        %v333 = vsel %vm326, %v329, 0.0
        %v334 = vsel %vm327, %v330, 0.0
        %v335 = vsel %vm239, %v333, 0.0
        %v336 = vrot.slane %v335, 4
        %v337 = vadd.f32 %v335, %v336
        %v338 = vrot.slane %v337, 2
        %v339 = vadd.f32 %v337, %v338
        %v340 = vrot.slane %v339, 1
        %v341 = vadd.f32 %v339, %v340
        %v342 = vsel %vm239, %v334, 0.0
        %v343 = vrot.slane %v342, 4
        %v344 = vadd.f32 %v342, %v343
        %v345 = vrot.slane %v344, 2
        %v346 = vadd.f32 %v344, %v345
        %v347 = vrot.slane %v346, 1
        %v348 = vadd.f32 %v346, %v347
        %v349 = vsub.f32 %v320, %v341
        %v350 = vsub.f32 %v321, %v348
        %352 = vst [vmem:[#allocation1] ss:$2 sm:$0xff] %v315
        %v353 = vld.sshfl [vmem:[#allocation1] sm:$0xff pattern:$0x75316420]
        %v354 = vld.sshfl [vmem:[#allocation1 + $0x8] sm:$0xff pattern:$0x75316420]
        %v357 = vsel %vm326, %v353, 0.0
        %v358 = vsel %vm327, %v354, 0.0
        %v359 = vsel %vm326, 1, 0
        %v360 = vsel %vm327, 1, 0
        %v361 = vcvt.s32.f32 %v359
        %v362 = vcvt.s32.f32 %v360
        %v363 = vadd.f32 %v349, %v350
        %v364 = vld [vmem:[#allocation2] sm:$0x1]
        %v365 = vadd.f32 %v364, %v363
        %366 = vst [vmem:[#allocation2] sm:$0x1] %v365
        %v367 = vadd.f32 %v357, %v358
        %v368 = vld [vmem:[#allocation3] sm:$0xf]
        %v369 = vadd.f32 %v368, %v367
        %370 = vst [vmem:[#allocation3] sm:$0xf] %v369
        %v371 = vrot.slane %v315, 4
        %v373 = vadd.f32 %v315, %v371
        %v374 = vld [vmem:[#allocation4] sm:$0xf]
        %v375 = vadd.f32 %v374, %v373
        %376 = vst [vmem:[#allocation4] sm:$0xf] %v375
        %v377 = vadd.f32 %v361, %v362
        %v378 = vld [vmem:[#allocation5] sm:$0xf]
        %v379 = vadd.f32 %v378, %v377
        %380 = vst [vmem:[#allocation5] sm:$0xf] %v379
        // Predicated region
        $region41: #{tpu_custom_call.1} parent=27 // pred_check
          %p381 = pneg %p223
        $region42: #{tpu_custom_call.1} parent=27 // pred_check_branch
          %383 = sbr.rel (%p381) target = $region44
        $region43: #{tpu_custom_call.1} parent=27 // pred_region
          %v384 = vld [vmem:[#allocation2] sm:$0x1]
          %vm385 = vcmask 1040384
          %v386 = vsel %vm385, %v384, 0.0
          %387 = vadd.xlane.f32.xlu0 %v386
          %v388 = vpop.xlane.xlu0 %387
          %v389 = vrot.slane %v388, 4
          %v390 = vadd.f32 %v388, %v389
          %v391 = vrot.slane %v390, 2
          %v392 = vadd.f32 %v390, %v391
          %v393 = vrot.slane %v392, 1
          %v394 = vadd.f32 %v392, %v393
          %s395 = vtos %v394
          %v396 = vld [vmem:[#allocation3] sm:$0xf]
          %v397 = vsel %vm239, %v396, 0.0
          %398 = vadd.xlane.f32.xlu0 %v397
          %v399 = vpop.xlane.xlu0 %398
          %v400 = vld [vmem:[#allocation4] sm:$0xf]
          %v401 = vsel %vm239, %v400, 0.0
          %402 = vadd.xlane.f32.xlu0 %v401
          %v403 = vpop.xlane.xlu0 %402
          %v404 = vld [vmem:[#allocation5] sm:$0xf]
          %v405 = vsel %vm239, %v404, 0.0
          %406 = vadd.xlane.f32.xlu0 %v405
          %v407 = vpop.xlane.xlu0 %406
          %v408 = vmul.f32 %v399, 2.0
          %v409 = vadd.f32 %v408, 1.0
          %v410 = vadd.f32 %v403, %v407
          %v411 = vadd.f32 %v410, 1.0
          %v412 = vrcp.pop %v411
          %v413 = vmul.f32 %v411, %v412
          %v414 = vsub.f32 1.0, %v413
          %v415 = vmul.f32 %v412, %v414
          %v416 = vadd.f32 %v412, %v415
          %vm417 = vweird.f32 %v411
          %vm418 = vweird.f32 %v412
          %vm419 = vmor %vm417, %vm418
          %v420 = vsel %vm419, %v412, %v416
          %v421 = vand.u32 2147483647, %v411
          %vm422 = vcmp.eq.f32.partialorder %v421, 8.507059e+37
          %v423 = vand.u32 %v411, 2147483648
          %v424 = vor.u32 1.1754944e-38, %v423
          %v425 = vsel %vm422, %v424, %v420
          %v426 = vmul.f32 %v409, %v425
          %vm427 = vcmask 3072
          %v428 = vsel %vm427, %v426, 0.0
          %429 = vadd.xlane.f32.xlu0 %v428
          %v430 = vpop.xlane.xlu0 %429
          %v431 = vrot.slane %v430, 4
          %v432 = vadd.f32 %v430, %v431
          %v433 = vrot.slane %v432, 2
          %v434 = vadd.f32 %v432, %v433
          %v435 = vrot.slane %v434, 1
          %v436 = vadd.f32 %v434, %v435
          %s437 = vtos %v436
          %vm438 = vcmp.eq.s32.totalorder %v323, 0
          %v439 = vstv %s395
          %v440 = vstv %s437
          %v441 = vsel %vm438, %v439, %v440
          %442 = vst [vmem:[%s220] sm:$0x3] %v441
        $region44: #{tpu_custom_call.1} parent=27 // pred_fallthru
          _
        %s443 = sand.u32 %s98, 1
        %s444 = scalar_lea.sflag [#allocation8], %s443
        %s445 = sand.u32 %s98, 1
        %s446 = smul.addr %s445, 2
        %s447 = scalar_lea.vmem [#allocation11], %s446
        // Predicated region
        $region45: #{tpu_custom_call.1} parent=27 // pred_check
          %p448 = pneg %p108
        $region46: #{tpu_custom_call.1} parent=27 // pred_check_branch
          %450 = sbr.rel (%p448) target = $region48
        $region47: #{tpu_custom_call.1} parent=27 // pred_region
          %452 = vsyncadd %s444, 0
          %s453 = smul.addr %s26, 2
          %s454 = scalar_lea.hbm %s2, %s453
          %s456 = sshll.u32 %s447, 4
          %s457 = int_to_ptr.vmem [resolvable:$true] %s456
          %s458 = sshll.u32 %s454, 4
          %s459 = int_to_ptr.hbm [resolvable:$true] %s458
          %461 = dma.vmem_to_hbm [thread:$0]  %s457, 32, %s459, %s444
        $region48: #{tpu_custom_call.1} parent=27 // pred_fallthru
          _
      $region28: #{tpu_custom_call.1} parent=5 // pred_fallthru
        _
      %p462 = scmp.le.s32.totalorder 2, %s17
      // Predicated region
      $region49: #{tpu_custom_call.1} parent=5 // pred_check
        %p463 = pneg %p462
      $region50: #{tpu_custom_call.1} parent=5 // pred_check_branch
        %465 = sbr.rel (%p463) target = $region52
      $region51: #{tpu_custom_call.1} parent=5 // pred_region
        %s466 = ssub.s32 %s17, 2
        // Predicated region
        $region53: #{tpu_custom_call.1} parent=51 // pred_check
          %p467 = pneg %p114
        $region54: #{tpu_custom_call.1} parent=51 // pred_check_branch
          %469 = sbr.rel (%p467) target = $region56
        $region55: #{tpu_custom_call.1} parent=51 // pred_region
          %s470 = sand.u32 %s99, 1
          %s471 = scalar_lea.sflag [#allocation8], %s470
          %s472 = sand.u32 %s99, 1
          %s473 = smul.addr %s472, 2
          %s474 = scalar_lea.vmem [#allocation11], %s473
          %476 = dma.done %s471, 32
        $region56: #{tpu_custom_call.1} parent=51 // pred_fallthru
          _
      $region52: #{tpu_custom_call.1} parent=5 // pred_fallthru
        _
    $region6: #{tpu_custom_call.1} parent=1 // loop_footer
      %s21 = sadd.s32 1, %s17
    $region7: #{tpu_custom_call.1} parent=1 // loop_footer_branch
      %16 = sbr.rel target = $region3
    $region8: #{tpu_custom_call.1} parent=1 // loop_exit
      _
    %477 = vsyncpa [#allocation7], 1
    %s478 = scalar_lea.sflag [#allocation7], 1
    %479 = vsyncpa %s478, 1
    %480 = vsyncpa [#allocation10], 1
    %s481 = scalar_lea.sflag [#allocation10], 1
    %482 = vsyncpa %s481, 1
    %483 = vsyncpa [#allocation8], 1
    %s484 = scalar_lea.sflag [#allocation8], 1
    %485 = vsyncpa %s484, 1

</llo_original>
